<compile_context>
chip_gen: v6e
topology: v6e:2x2x1
jax: 0.10.0
libtpu: 0.0.40
codegen_flags: <defaults>
</compile_context>

<pallas_src>
import numbers
from typing import List, Sequence, Tuple, Union

import jax
import jax.numpy as jnp
from jax.experimental import pallas as pl
from jax.experimental.pallas import tpu as pltpu


def _setup_size(size):
    if isinstance(size, numbers.Number):
        return (int(size), int(size))
    if isinstance(size, Sequence) and len(size) == 1:
        return (int(size[0]), int(size[0]))
    if len(size) != 2:
        raise ValueError("Please provide only two dimensions (h, w) for size.")
    return (int(size[0]), int(size[1]))


def _crop_pad_geometry(H, W, ch, cw):
    """Static offset arithmetic mirroring the torchvision pad + center-crop composition."""
    pad_left = (cw - W) // 2 if cw > W else 0
    pad_top = (ch - H) // 2 if ch > H else 0
    pad_right = (cw - W + 1) // 2 if cw > W else 0
    pad_bottom = (ch - H + 1) // 2 if ch > H else 0
    Hp = H + pad_top + pad_bottom
    Wp = W + pad_left + pad_right
    # int(round(.)) matches Python rounding used by torchvision here.
    crop_top = int(round((Hp - ch) / 2.0))
    crop_left = int(round((Wp - cw) / 2.0))
    # Map output pixel (i, j) -> original input pixel (i + off_h, j + off_w);
    # anything out of bounds is the padded `fill` region.
    off_h = crop_top - pad_top
    off_w = crop_left - pad_left
    oh0 = max(0, -off_h)
    oh1 = min(ch, H - off_h)
    ow0 = max(0, -off_w)
    ow1 = min(cw, W - off_w)
    copy_h = max(0, oh1 - oh0)
    copy_w = max(0, ow1 - ow0)
    ih0 = oh0 + off_h
    iw0 = ow0 + off_w
    return oh0, ow0, ih0, iw0, copy_h, copy_w


def _vmem_capacity_bytes(default_bytes=64 << 20):
    """Physical VMEM per TensorCore; conservative v7x-sized fallback."""
    try:
        info = pltpu.get_tpu_info()
        cap = int(getattr(info, "vmem_capacity_bytes", 0))
        if cap > 0:
            return cap
    except Exception:
        pass
    return default_bytes


def _round_up(a, m):
    return -(-a // m) * m


def _pick_batch_tile(nc, per_row_bytes, budget_bytes):
    """Largest divisor of nc whose (padded) VMEM footprint fits the budget,
    preferring >= 2 grid steps so both v7x TensorCores get work."""
    divisors = [d for d in range(1, nc + 1) if nc % d == 0]
    best_fit = None
    for tb in sorted(divisors, reverse=True):
        if tb * per_row_bytes > budget_bytes:
            continue
        if best_fit is None:
            best_fit = tb
        if nc // tb >= 2 or nc == 1:
            return tb
    if best_fit is not None:
        return best_fit
    # TODO(synk): add H-row tiling for images where even a single (ch, cw)
    # block exceeds the VMEM budget; for now fall back to tb=1 and raise the
    # vmem limit as far as possible.
    return 1


def _make_kernel(fill, tb, ch, cw, copy_h, copy_w, oh0, ow0, ih0, iw0,
                 has_copy, pure_copy):
    """Kernel for one (tb, ch, cw) output block. Input stays in HBM (pl.ANY)."""

    if not has_copy:
        # Output lies entirely in the padded region: pure fill, input never read.
        def fill_only_kernel(x_hbm, o_ref):
            o_ref[...] = jnp.full(o_ref.shape, fill, dtype=o_ref.dtype)

        return fill_only_kernel

    if pure_copy:
        # Pure-crop fast path: DMA the HBM window directly into the output
        # block — zero VMEM->VMEM traffic, zero fill work. The auto output
        # pipeline overlaps step i's read with step i-1's HBM writeback.
        def copy_kernel(x_hbm, o_ref, sem):
            r0 = pl.multiple_of(pl.program_id(0) * tb, tb)
            cp = pltpu.make_async_copy(
                x_hbm.at[pl.ds(r0, tb), pl.ds(ih0, ch), pl.ds(iw0, cw)],
                o_ref,
                sem,
            )
            cp.start()
            cp.wait()

        return copy_kernel

    # Mixed crop+pad: land the window in a VMEM buffer (its destination inside
    # o_ref is at unaligned sublane/lane offsets), fill the whole block with
    # `fill` while the DMA is in flight, then overwrite the copy window.
    def pad_kernel(x_hbm, o_ref, buf, sem):
        r0 = pl.multiple_of(pl.program_id(0) * tb, tb)
        cp = pltpu.make_async_copy(
            x_hbm.at[pl.ds(r0, tb), pl.ds(ih0, copy_h), pl.ds(iw0, copy_w)],
            buf,
            sem,
        )
        cp.start()
        # One unmasked full-block fill (replaces four narrow masked strip
        # stores); it targets o_ref while the DMA targets buf, so there is no
        # write race, and it is hidden behind the in-flight HBM read.
        o_ref[...] = jnp.full(o_ref.shape, fill, dtype=o_ref.dtype)
        cp.wait()
        o_ref[:, oh0:oh0 + copy_h, ow0:ow0 + copy_w] = buf[...]

    return pad_kernel


def center_crop_or_pad_pallas(
    img: jax.Array,
    output_size: Union[int, List[int], Tuple[int, int]],
    fill: Union[int, float] = 0,
    padding_mode: str = "constant",
) -> jax.Array:
    """Pallas TPU implementation of timm's center_crop_or_pad for NCHW tensors."""
    if padding_mode != "constant":
        # TODO(synk): only 'constant' padding_mode is implemented (reflect/edge not supported).
        raise NotImplementedError("Only padding_mode='constant' is supported.")
    if not isinstance(fill, numbers.Number):
        # TODO(synk): per-channel (tuple) fill not implemented; scalar fill only.
        raise NotImplementedError("Only scalar fill is supported.")
    if img.ndim != 4:
        raise ValueError("Expected a 4D NCHW tensor.")

    ch, cw = _setup_size(output_size)
    N, C, H, W = img.shape
    oh0, ow0, ih0, iw0, copy_h, copy_w = _crop_pad_geometry(H, W, ch, cw)
    has_copy = copy_h > 0 and copy_w > 0
    pure_copy = has_copy and oh0 == 0 and ow0 == 0 and copy_h == ch and copy_w == cw

    dtype = img.dtype
    itemsize = jnp.dtype(dtype).itemsize
    sub = 8 * max(1, 4 // itemsize)  # sublane rows per vreg tile for this dtype

    nc = N * C
    # (sublane, lane)-padded footprints, not raw element counts.
    out_row = _round_up(ch, sub) * _round_up(cw, 128) * itemsize
    buf_row = 0
    if has_copy and not pure_copy:
        buf_row = _round_up(copy_h, sub) * _round_up(copy_w, 128) * itemsize
    per_row = 2 * out_row + buf_row  # output block is double-buffered by the pipeline

    capacity = _vmem_capacity_bytes()
    # ~56 MiB budget on 128 MiB VMEM (v5e/v6e), ~24 MiB on v7x's 64 MiB per TC.
    budget = max(4 << 20, capacity // 2 - (8 << 20))
    tb = _pick_batch_tile(nc, per_row, budget)
    n_steps = nc // tb

    footprint = tb * per_row
    vmem_limit = int(min(capacity - (2 << 20), max(32 << 20, footprint + (16 << 20))))

    kernel = _make_kernel(fill, tb, ch, cw, copy_h, copy_w,
                          oh0, ow0, ih0, iw0, has_copy, pure_copy)

    scratch_shapes = []
    if has_copy:
        if not pure_copy:
            scratch_shapes.append(pltpu.VMEM((tb, copy_h, copy_w), dtype))  # landing buffer
        scratch_shapes.append(pltpu.SemaphoreType.DMA(()))

    grid_spec = pltpu.PrefetchScalarGridSpec(
        num_scalar_prefetch=0,
        grid=(n_steps,),
        in_specs=[
            # Keep the input in HBM; the kernel DMAs only the needed window.
            pl.BlockSpec(memory_space=pl.ANY),
        ],
        out_specs=pl.BlockSpec((tb, ch, cw), lambda r: (r, 0, 0)),
        scratch_shapes=scratch_shapes,
    )

    # Pure memory traffic: read only the copied window, write the full output.
    bytes_accessed = nc * (copy_h * copy_w + ch * cw) * itemsize

    x_flat = img.reshape(nc, H, W)  # free for contiguous NCHW

    out_flat = pl.pallas_call(
        kernel,
        out_shape=jax.ShapeDtypeStruct((nc, ch, cw), dtype),
        grid_spec=grid_spec,
        compiler_params=pltpu.CompilerParams(
            dimension_semantics=("parallel",),
            vmem_limit_bytes=vmem_limit,
        ),
        cost_estimate=pl.CostEstimate(
            flops=0, transcendentals=0, bytes_accessed=bytes_accessed
        ),
    )(x_flat)

    return out_flat.reshape(N, C, ch, cw)


class CenterCropOrPad:
    """JAX/Pallas port of timm's CenterCropOrPad module."""

    def __init__(self, size, fill=0, padding_mode="constant"):
        self.size = _setup_size(size)
        self.fill = fill
        self.padding_mode = padding_mode

    def __call__(self, img):
        return center_crop_or_pad_pallas(
            img, self.size, fill=self.fill, padding_mode=self.padding_mode
        )

    def __repr__(self):
        return f"{self.__class__.__name__}(size={self.size})"


def _reference(img, output_size, fill=0):
    """Pure-JAX reference reproducing the same semantics (for verification)."""
    ch, cw = _setup_size(output_size)
    N, C, H, W = img.shape
    pad_left = (cw - W) // 2 if cw > W else 0
    pad_top = (ch - H) // 2 if ch > H else 0
    pad_right = (cw - W + 1) // 2 if cw > W else 0
    pad_bottom = (ch - H + 1) // 2 if ch > H else 0
    x = jnp.pad(
        img,
        ((0, 0), (0, 0), (pad_top, pad_bottom), (pad_left, pad_right)),
        mode="constant",
        constant_values=fill,
    )
    Hp, Wp = x.shape[-2], x.shape[-1]
    crop_top = int(round((Hp - ch) / 2.0))
    crop_left = int(round((Wp - cw) / 2.0))
    return x[:, :, crop_top:crop_top + ch, crop_left:crop_left + cw]


if __name__ == "__main__":
    key = jax.random.PRNGKey(0)
    # Input image batch, NCHW.
    x = jax.random.normal(key, (2, 4, 16, 16), dtype=jnp.float32)

    # Output size (12, 20): crops the height (16 -> 12) and pads the width (16 -> 20).
    module = CenterCropOrPad(size=(12, 20), fill=0)
    out = jax.block_until_ready(module(x))
    ref = _reference(x, (12, 20), fill=0)
    assert out.shape == (2, 4, 12, 20), out.shape
    assert jnp.allclose(out, ref), "Pallas output mismatch vs reference (crop+pad)"

    # Pure-crop fast path (direct DMA into the output block).
    out2 = jax.block_until_ready(CenterCropOrPad(size=8)(x))
    assert jnp.allclose(out2, _reference(x, 8)), "mismatch (pure crop)"

    # Pure-pad path with non-zero fill.
    out3 = jax.block_until_ready(CenterCropOrPad(size=24, fill=1)(x))
    assert jnp.allclose(out3, _reference(x, 24, fill=1)), "mismatch (pure pad)"

    # Asymmetric case: pad height, crop width.
    out4 = jax.block_until_ready(CenterCropOrPad(size=(20, 10), fill=2)(x))
    assert jnp.allclose(out4, _reference(x, (20, 10), fill=2)), "mismatch (pad H, crop W)"

    # Identity size (also exercises the pure-copy path).
    out5 = jax.block_until_ready(CenterCropOrPad(size=16)(x))
    assert jnp.allclose(out5, x), "mismatch (identity)"

    print("KERNEL_OK")
</pallas_src>

<mosaic_0001>
module attributes {stable_mosaic.version = 11 : i64} {
  func.func @pad_kernel(%arg0: i32, %arg1: memref<8x16x16xf32, #tpu.memory_space<any>>, %arg2: memref<4x12x20xf32, #tpu.memory_space<vmem>>, %arg3: memref<4x12x16xf32, #tpu.memory_space<vmem>>, %arg4: memref<!tpu.dma_semaphore, #tpu.memory_space<semaphore_mem>>) attributes {dimension_semantics = [#tpu.dimension_semantics<parallel>], iteration_bounds = array<i64: 2>, scalar_prefetch = 0 : i64, scratch_operands = 2 : i64, tpu.core_type = #tpu.core_type<tc>, window_params = [{}, {transform_indices = @transform_1, window_bounds = array<i64: 4, 12, 20>}]} {
    %c4_i32 = arith.constant 4 : i32
    %0 = arith.muli %arg0, %c4_i32 : i32
    %1 = tpu.assume_multiple %0, 4 : i32
    %c2_i32 = arith.constant 2 : i32
    %c0_i32 = arith.constant 0 : i32
    %2 = tpu.memref_slice %arg1[%1, %c2_i32, %c0_i32] : memref<8x16x16xf32, #tpu.memory_space<any>> -> memref<4x12x16xf32, #tpu.memory_space<any>>
    tpu.enqueue_dma source(%2 : memref<4x12x16xf32, #tpu.memory_space<any>>) target(%arg3 : memref<4x12x16xf32, #tpu.memory_space<vmem>>) target_semaphore(%arg4 : memref<!tpu.dma_semaphore, #tpu.memory_space<semaphore_mem>>)
    %cst = arith.constant 0.000000e+00 : f32
    %3 = vector.broadcast %cst : f32 to vector<4x12x20xf32>
    %c0 = arith.constant 0 : index
    %c0_0 = arith.constant 0 : index
    %c0_1 = arith.constant 0 : index
    %4 = vector.load %arg2[%c0, %c0_0, %c0_1] : memref<4x12x20xf32, #tpu.memory_space<vmem>>, vector<4x12x20xf32>
    tpu.vector_store %arg2[%c0, %c0_0, %c0_1], %3 {strides = array<i32>} : memref<4x12x20xf32, #tpu.memory_space<vmem>>, vector<4x12x20xf32>,
    %c2_i32_2 = arith.constant 2 : i32
    %c0_i32_3 = arith.constant 0 : i32
    %5 = tpu.memref_slice %arg1[%1, %c2_i32_2, %c0_i32_3] : memref<8x16x16xf32, #tpu.memory_space<any>> -> memref<4x12x16xf32, #tpu.memory_space<any>>
    tpu.wait_dma2 semaphore(%arg4 : memref<!tpu.dma_semaphore, #tpu.memory_space<semaphore_mem>>) src(%5 : memref<4x12x16xf32, #tpu.memory_space<any>>) dst(%arg3 : memref<4x12x16xf32, #tpu.memory_space<vmem>>)
    %c0_4 = arith.constant 0 : index
    %c0_5 = arith.constant 0 : index
    %c0_6 = arith.constant 0 : index
    %6 = vector.load %arg3[%c0_4, %c0_5, %c0_6] : memref<4x12x16xf32, #tpu.memory_space<vmem>>, vector<4x12x16xf32>
    %c0_7 = arith.constant 0 : index
    %c0_8 = arith.constant 0 : index
    %c2 = arith.constant 2 : index
    %7 = vector.load %arg2[%c0_7, %c0_8, %c2] : memref<4x12x20xf32, #tpu.memory_space<vmem>>, vector<4x12x16xf32>
    tpu.vector_store %arg2[%c0_7, %c0_8, %c2], %6 {strides = array<i32>} : memref<4x12x20xf32, #tpu.memory_space<vmem>>, vector<4x12x16xf32>,
    return
  }
  func.func @transform_1(%arg0: i32) -> (i32, i32, i32) {
    %c0_i32 = arith.constant 0 : i32
    %c0_i32_0 = arith.constant 0 : i32
    %c0_i32_1 = arith.constant 0 : i32
    return %arg0, %c0_i32, %c0_i32_0 : i32, i32, i32
  }
}

</mosaic_0001>

<llo_original>
// kernel: tpu_custom_call.1
$region0: #{tpu_custom_call.1}
  #allocation0 [shape = 'u32[]', space=smem, size = 0x4, offset = 0x4, fixed_abs, tag = 'smem constant byte address 0x4 - core index']
  #allocation1 [shape = 'u32[144,128]{1,0:T(1,128)}', space=vmem, size = 0x12000, scoped, tag = 'internal scratch']
  #allocation2 [shape = 'f32[4,12,16]{2,1,0:T(8,128)}', space=vmem, size = 0x8000, scoped, tag = 'scratch operand']
  #allocation3 [shape = 's32[1]{0}', space=sflag, size = 0x4, scoped, tag = 'scratch operand']
  #allocation4 [shape = 's32[]', space=sflag, size = 0x4, offset = 0, fixed_abs, tag = 'sflag constant byte address 0x0 - dummy sync flag']
  %s0 = inlined_call_operand.hbm [shape: f32[8,16,16], index: 0, kind: input, shape index: {}]
  %s1 = inlined_call_operand.vmem [shape: f32[8,12,20], index: 1, kind: output, shape index: {}]
  %s2 = sld [smem:[#allocation0]]
  $region25: #{tpu_custom_call.1} parent=0
    _
  %s4 = ssub.s32 1, %s2
  %s5 = scalar_select 0, %s4, %s2
  loop: start=0, step=1, limit=3
  $region2: #{tpu_custom_call.1} parent=0 // loop_pre_header
    _
  $region3: #{tpu_custom_call.1} parent=0 // loop_header
    %s7 = sphi 0, %s11
    %p8 = scmp.ge.s32.totalorder %s7, 3
    %s16 = sphi 0, %s18
    %s19 = sphi 0, %s16
    %s29 = sphi 0, %s19
  $region4: #{tpu_custom_call.1} parent=0 // loop_header_branch
    %10 = sbr.rel (%p8) target = $region8
  $region5: #{tpu_custom_call.1} parent=0 // loop_body
    %s12 = ssub.s32 %s7, 1
    %s13 = sadd.s32 %s7, 1
    %s14 = ssub.s32 %s7, %s13
    %p15 = scmp.eq.s32.totalorder %s14, 0
    %s17 = sadd.s32 %s16, 1
    %s18 = scalar_select %p15, %s16, %s17
    %p20 = pneg %p15
    %p21 = scmp.eq.s32.totalorder %s7, 1
    %p22 = por %p20, %p21
    %p23 = scmp.ne.s32.totalorder %s16, %s19
    %p24 = scmp.eq.s32.totalorder %s7, 0
    %p25 = por %p23, %p24
    %p26 = scmp.ne.s32.totalorder %s16, %s19
    %p27 = scmp.eq.s32.totalorder %s12, 1
    %p28 = por %p26, %p27
    %p30 = scmp.ne.s32.totalorder %s19, %s29
    %p31 = scmp.eq.s32.totalorder %s12, 0
    %p32 = por %p30, %p31
    %p33 = scmp.lt.s32.totalorder %s7, 2
    // Predicated region
    $region9: #{tpu_custom_call.1} parent=5 // pred_check
      %p34 = pneg %p33
    $region10: #{tpu_custom_call.1} parent=5 // pred_check_branch
      %36 = sbr.rel (%p34) target = $region12
    $region11: #{tpu_custom_call.1} parent=5 // pred_region
      %p37 = pneg %p25
      %p38 = pneg %p22
      %s39 = smul.u32 4, %s7
      %p40 = scmp.lt.s32.totalorder %s39, 7
      %s41 = scalar_select %p40, %s39, 7
      %s42 = smul.addr %s41, 2
      %s43 = smul.addr %s42, 8
      %s44 = scalar_lea.vmem %s1, %s43
      %s45 = smul.u32 4, %s7
      %p46 = scmp.lt.s32.totalorder %s45, 7
      %s47 = scalar_select %p46, %s45, 7
      %s48 = smul.addr %s47, 2
      %s49 = smul.addr %s48, 8
      %s50 = scalar_lea.vmem %s1, %s49
      %s51 = smul.u32 4, %s7
      %s52 = smul.u32 %s7, 4
      %s53 = smul.u32 %s52, 16
      %s54 = sadd.s32 2, %s53
      %s55 = smul.addr %s54, 16
      %s56 = scalar_lea.hbm %s0, %s55
      %s58 = sshll.u32 [#allocation2], 4
      %s59 = int_to_ptr.vmem [resolvable:$true] %s58
      %61 = dma.hbm_to_vmem [thread:$0]  %s56, 768, %s59, [#allocation3], 256, 256, 12
      %vm62 = vcmask 162816
      %63 = vst.msk [vmem:[%s50] sm:$0xff] %vm62, 0.0
      %vm64 = vcmask 158720
      %65 = vst.msk [vmem:[%s50 + $0x8] sm:$0xf] %vm64, 0.0
      %66 = vst.msk [vmem:[%s50 + $0x10] sm:$0xff] %vm62, 0.0
      %67 = vst.msk [vmem:[%s50 + $0x18] sm:$0xf] %vm64, 0.0
      %68 = vst.msk [vmem:[%s50 + $0x20] sm:$0xff] %vm62, 0.0
      %69 = vst.msk [vmem:[%s50 + $0x28] sm:$0xf] %vm64, 0.0
      %70 = vst.msk [vmem:[%s50 + $0x30] sm:$0xff] %vm62, 0.0
      %71 = vst.msk [vmem:[%s50 + $0x38] sm:$0xf] %vm64, 0.0
      %s72 = smul.u32 4, 12
      %s73 = smul.u32 %s72, 1
      %s74 = sshll.u32 %s73, 4
      %75 = dma.done [#allocation3], %s74
      %v76 = vld [vmem:[#allocation2] sm:$0xff]
      %v77 = vld [vmem:[#allocation2 + $0x8] sm:$0xf]
      %v78 = vld [vmem:[#allocation2 + $0x10] sm:$0xff]
      %v79 = vld [vmem:[#allocation2 + $0x18] sm:$0xf]
      %v80 = vld [vmem:[#allocation2 + $0x20] sm:$0xff]
      %v81 = vld [vmem:[#allocation2 + $0x28] sm:$0xf]
      %v82 = vld [vmem:[#allocation2 + $0x30] sm:$0xff]
      %v83 = vld [vmem:[#allocation2 + $0x38] sm:$0xf]
      %92 = vrot.lane.b32.xlu0 %v76, 2
      %v93 = vpop.permute.xlu0 %92
      %94 = vrot.lane.b32.xlu0 %v77, 2
      %v95 = vpop.permute.xlu0 %94
      %96 = vrot.lane.b32.xlu0 %v78, 2
      %v97 = vpop.permute.xlu0 %96
      %98 = vrot.lane.b32.xlu0 %v79, 2
      %v99 = vpop.permute.xlu0 %98
      %100 = vrot.lane.b32.xlu0 %v80, 2
      %v101 = vpop.permute.xlu0 %100
      %102 = vrot.lane.b32.xlu0 %v81, 2
      %v103 = vpop.permute.xlu0 %102
      %104 = vrot.lane.b32.xlu0 %v82, 2
      %v105 = vpop.permute.xlu0 %104
      %106 = vrot.lane.b32.xlu0 %v83, 2
      %v107 = vpop.permute.xlu0 %106
      %vm116 = vcmask 146448
      %117 = vst.msk [vmem:[%s50] sm:$0xff] %vm116, %v93
      %vm118 = vcmask 142352
      %119 = vst.msk [vmem:[%s50 + $0x8] sm:$0xf] %vm118, %v95
      %120 = vst.msk [vmem:[%s50 + $0x10] sm:$0xff] %vm116, %v97
      %121 = vst.msk [vmem:[%s50 + $0x18] sm:$0xf] %vm118, %v99
      %122 = vst.msk [vmem:[%s50 + $0x20] sm:$0xff] %vm116, %v101
      %123 = vst.msk [vmem:[%s50 + $0x28] sm:$0xf] %vm118, %v103
      %124 = vst.msk [vmem:[%s50 + $0x30] sm:$0xff] %vm116, %v105
      %125 = vst.msk [vmem:[%s50 + $0x38] sm:$0xf] %vm118, %v107
      %s126 = smul.u32 4, %s7
      %p127 = scmp.lt.s32.totalorder %s126, 7
      %s128 = scalar_select %p127, %s126, 7
      %s129 = smul.addr %s128, 2
      %s130 = smul.addr %s129, 8
      %s131 = scalar_lea.vmem %s1, %s130
      // Predicated region
      $region13: #{tpu_custom_call.1} parent=11 // pred_check
        %p132 = pneg %p22
      $region14: #{tpu_custom_call.1} parent=11 // pred_check_branch
        %134 = sbr.rel (%p132) target = $region16
      $region15: #{tpu_custom_call.1} parent=11 // pred_region
        %s135 = smul.u32 4, %s7
      $region16: #{tpu_custom_call.1} parent=11 // pred_fallthru
        _
    $region12: #{tpu_custom_call.1} parent=5 // pred_fallthru
      _
    %p136 = scmp.le.s32.totalorder 1, %s7
    // Predicated region
    $region17: #{tpu_custom_call.1} parent=5 // pred_check
      %p137 = pneg %p136
    $region18: #{tpu_custom_call.1} parent=5 // pred_check_branch
      %139 = sbr.rel (%p137) target = $region20
    $region19: #{tpu_custom_call.1} parent=5 // pred_region
      %s140 = ssub.s32 %s7, 1
      // Predicated region
      $region21: #{tpu_custom_call.1} parent=19 // pred_check
        %p141 = pneg %p28
      $region22: #{tpu_custom_call.1} parent=19 // pred_check_branch
        %143 = sbr.rel (%p141) target = $region24
      $region23: #{tpu_custom_call.1} parent=19 // pred_region
        %s144 = smul.u32 4, %s12
        %p145 = scmp.lt.s32.totalorder %s144, 7
        %s146 = scalar_select %p145, %s144, 7
        %s147 = smul.addr %s146, 2
        %s148 = smul.addr %s147, 8
        %s149 = scalar_lea.vmem %s1, %s148
      $region24: #{tpu_custom_call.1} parent=19 // pred_fallthru
        _
    $region20: #{tpu_custom_call.1} parent=5 // pred_fallthru
      _
  $region6: #{tpu_custom_call.1} parent=0 // loop_footer
    %s11 = sadd.s32 1, %s7
  $region7: #{tpu_custom_call.1} parent=0 // loop_footer_branch
    %6 = sbr.rel target = $region3
  $region8: #{tpu_custom_call.1} parent=0 // loop_exit
    _
  %150 = vsyncmov [#allocation3]
  %s151 = vpop.sfrf %150
  %p152 = scmp.eq.s32.totalorder %s151, 0
  %p153 = pneg %p152
  %155 = shalt.err (%p153)

</llo_original>
